<compile_context>
chip_gen: v7x
topology: tpu7x:2x2x1
jax: 0.10.0
libtpu: 0.0.40
codegen_flags: <defaults>
</compile_context>

<pallas_src>
import functools

import jax
import jax.numpy as jnp
from jax.experimental import pallas as pl
from jax.experimental.pallas import tpu as pltpu


def _mlp_kernel(x_ref, sp_ref, w2_ref, w3_ref, w4_ref, o_ref):
    # Transposed layout: batch (TM) on lanes, hidden dims on sublanes.
    x = x_ref[...]                       # (1, TM)   f32
    sp = sp_ref[...]                     # (352+Cpad, 1) f32: [w1 | b1 | b2 | b3 | b4_pad]
    w1 = sp[0:128]                       # (128, 1)
    b1 = sp[128:256]                     # (128, 1)
    b2 = sp[256:320]                     # (64, 1)
    b3 = sp[320:352]                     # (32, 1)
    b4 = sp[352:]                        # (Cpad, 1)

    # Layer 1 (K = 1): VPU broadcast outer product, f32 math (v5e VPU has no
    # bf16 ALU); cast the result to bf16 once for the MXU chain.
    h = jnp.maximum(w1 * x + b1, 0.0)                                   # (128, TM) f32
    h = h.astype(jnp.bfloat16)

    # Layers 2-4 on the MXU: bf16 inputs, f32 accumulation.
    h = jnp.maximum(
        jnp.dot(w2_ref[...], h, preferred_element_type=jnp.float32) + b2, 0.0)   # (64, TM)
    h = h.astype(jnp.bfloat16)
    h = jnp.maximum(
        jnp.dot(w3_ref[...], h, preferred_element_type=jnp.float32) + b3, 0.0)   # (32, TM)
    h = h.astype(jnp.bfloat16)
    out = jnp.dot(w4_ref[...], h, preferred_element_type=jnp.float32) + b4       # (Cpad, TM)
    o_ref[...] = out.astype(o_ref.dtype)


@functools.partial(jax.jit, static_argnames=("tile_m",))
def traj_mod_forward(x, params, tile_m=1024):
    """x: (N, 1) float32; params: PyTorch-convention (out, in) weights, (out, 1) biases."""
    n, in_dim = x.shape
    assert in_dim == 1

    w1, b1 = params["w1"], params["b1"]
    w2, b2 = params["w2"], params["b2"]
    w3, b3 = params["w3"], params["b3"]
    w4, b4 = params["w4"], params["b4"]
    num_coord = w4.shape[0]

    # --- Tile selection (all static at trace time) ---------------------------
    # Lane tiles must be multiples of 256 (full MXU N on v6e/v7x).  Clamp to
    # the 256-rounded batch so small N runs as ONE grid step (best on the
    # single-TC v5e/v6e); for large N on v7x, pick tile_m ~ round(N/2, 256)
    # at the call site to get >=2 even "parallel" steps across both TCs.
    tile_m = max(256, (int(tile_m) // 256) * 256)
    n_min = pl.cdiv(n, 256) * 256
    tile_m = min(tile_m, n_min)
    n_pad = pl.cdiv(n, tile_m) * tile_m
    grid = (n_pad // tile_m,)

    # --- Parameter packing (few hundred floats, negligible) ------------------
    c_pad = max(8, pl.cdiv(num_coord, 8) * 8)      # pad output rows to a sublane tile
    w4_p = jnp.zeros((c_pad, 32), w4.dtype).at[:num_coord].set(w4)
    b4_p = jnp.zeros((c_pad, 1), b4.dtype).at[:num_coord].set(b4)
    # Small-param slab: w1 + all biases, all slice offsets multiples of 8.
    sp = jnp.concatenate([w1, b1, b2, b3, b4_p], axis=0).astype(jnp.float32)
    w2b = w2.astype(jnp.bfloat16)
    w3b = w3.astype(jnp.bfloat16)
    w4b = w4_p.astype(jnp.bfloat16)

    # Batch onto lanes: (N, 1) -> (1, N) is a free reshape (no transpose);
    # pad only if N is not a tile multiple (padded cols computed, sliced off).
    x_t = x.astype(jnp.float32).reshape(1, n)
    if n_pad != n:
        x_t = jnp.pad(x_t, ((0, 0), (0, n_pad - n)))

    # Parameters are fully VMEM-resident with constant index_maps.
    full = lambda a: pl.BlockSpec(a.shape, lambda i: (0, 0))

    # Working set per step is ~1.5 KB/column; only raise the scoped-VMEM
    # limit for very large tiles.
    vmem_limit = (48 * 1024 * 1024) if tile_m >= 4096 else None

    out_t = pl.pallas_call(
        _mlp_kernel,
        out_shape=jax.ShapeDtypeStruct((c_pad, n_pad), jnp.float32),
        grid_spec=pltpu.PrefetchScalarGridSpec(
            num_scalar_prefetch=0,
            grid=grid,
            in_specs=[
                pl.BlockSpec((1, tile_m), lambda i: (0, i)),   # x tile (batch on lanes)
                full(sp),                                      # w1 + biases slab (f32)
                full(w2b), full(w3b), full(w4b),               # bf16 MXU weights
            ],
            out_specs=pl.BlockSpec((c_pad, tile_m), lambda i: (0, i)),
        ),
        compiler_params=pltpu.CompilerParams(
            dimension_semantics=("parallel",),   # shards batch tiles across v7x TCs
            vmem_limit_bytes=vmem_limit,
        ),
    )(x_t, sp, w2b, w3b, w4b)

    # Drop row/column padding and return in the PyTorch (N, numCoord)
    # convention.  (The transpose is a tiny relayout outside the kernel;
    # consumers that accept (numCoord, N) can use out_t[:num_coord, :n].)
    return out_t[:num_coord, :n].T


def init_params(key, num_coord):
    """nn.Linear-style U(-1/sqrt(fan_in), +1/sqrt(fan_in)) init.

    Weights stored PyTorch-style as (out, in); biases as (out, 1) so they
    broadcast over the lane (batch) axis inside the kernel.
    """
    dims = [(1, 128), (128, 64), (64, 32), (32, num_coord)]
    params = {}
    for idx, (fan_in, fan_out) in enumerate(dims, start=1):
        key, kw, kb = jax.random.split(key, 3)
        bound = 1.0 / (fan_in ** 0.5)
        params[f"w{idx}"] = jax.random.uniform(
            kw, (fan_out, fan_in), jnp.float32, minval=-bound, maxval=bound)
        params[f"b{idx}"] = jax.random.uniform(
            kb, (fan_out, 1), jnp.float32, minval=-bound, maxval=bound)
    return params


def reference_forward_f32(x, params):
    h = jnp.maximum(x @ params["w1"].T + params["b1"].T, 0.0)
    h = jnp.maximum(h @ params["w2"].T + params["b2"].T, 0.0)
    h = jnp.maximum(h @ params["w3"].T + params["b3"].T, 0.0)
    return h @ params["w4"].T + params["b4"].T


def reference_forward_bf16(x, params):
    """Same bf16-on-MXU / f32-accumulate arithmetic as the kernel."""
    bf = jnp.bfloat16
    h = jnp.maximum(x @ params["w1"].T + params["b1"].T, 0.0)
    h = jnp.maximum(
        jnp.dot(h.astype(bf), params["w2"].T.astype(bf),
                preferred_element_type=jnp.float32) + params["b2"].T, 0.0)
    h = jnp.maximum(
        jnp.dot(h.astype(bf), params["w3"].T.astype(bf),
                preferred_element_type=jnp.float32) + params["b3"].T, 0.0)
    return jnp.dot(h.astype(bf), params["w4"].T.astype(bf),
                   preferred_element_type=jnp.float32) + params["b4"].T


if __name__ == "__main__":
    num_coord = 3     # numCoord
    batch = 256       # one lane-dense 256-column tile -> single grid step

    key = jax.random.PRNGKey(0)
    key, kx = jax.random.split(key)
    x = jax.random.normal(kx, (batch, 1), jnp.float32)
    params = init_params(key, num_coord)

    out = traj_mod_forward(x, params)
    out = jax.block_until_ready(out)
    assert out.shape == (batch, num_coord)

    # Tight check vs. a reference using the same bf16/f32-accumulate math.
    ref_bf16 = reference_forward_bf16(x, params)
    assert jnp.allclose(out, ref_bf16, atol=2e-3, rtol=2e-3)

    # Loose check vs. the full-f32 PyTorch-equivalent reference (bf16 MXU
    # inputs give ~1e-2-level relative deviation through the K=128 layer).
    ref_f32 = reference_forward_f32(x, params)
    assert jnp.allclose(out, ref_f32, atol=5e-2, rtol=5e-2)

    print("KERNEL_OK")
</pallas_src>

<mosaic_0001>
module attributes {stable_mosaic.version = 11 : i64} {
  func.func @_mlp_kernel(%arg0: i32, %arg1: memref<1x256xf32, #tpu.memory_space<vmem>>, %arg2: memref<360x1xf32, #tpu.memory_space<vmem>>, %arg3: memref<64x128xbf16, #tpu.memory_space<vmem>>, %arg4: memref<32x64xbf16, #tpu.memory_space<vmem>>, %arg5: memref<8x32xbf16, #tpu.memory_space<vmem>>, %arg6: memref<8x256xf32, #tpu.memory_space<vmem>>) attributes {dimension_semantics = [#tpu.dimension_semantics<parallel>], iteration_bounds = array<i64: 1>, scalar_prefetch = 0 : i64, scratch_operands = 0 : i64, tpu.core_type = #tpu.core_type<tc>, window_params = [{transform_indices = @transform_0, window_bounds = array<i64: 1, 256>}, {pipeline_mode = #tpu.pipeline_mode<synchronous>, transform_indices = @transform_1, window_bounds = array<i64: 360, 1>}, {pipeline_mode = #tpu.pipeline_mode<synchronous>, transform_indices = @transform_2, window_bounds = array<i64: 64, 128>}, {pipeline_mode = #tpu.pipeline_mode<synchronous>, transform_indices = @transform_3, window_bounds = array<i64: 32, 64>}, {pipeline_mode = #tpu.pipeline_mode<synchronous>, transform_indices = @transform_4, window_bounds = array<i64: 8, 32>}, {transform_indices = @transform_5, window_bounds = array<i64: 8, 256>}]} {
    %c0 = arith.constant 0 : index
    %c0_0 = arith.constant 0 : index
    %0 = vector.load %arg1[%c0, %c0_0] : memref<1x256xf32, #tpu.memory_space<vmem>>, vector<1x256xf32>
    %c0_1 = arith.constant 0 : index
    %c0_2 = arith.constant 0 : index
    %1 = vector.load %arg2[%c0_1, %c0_2] : memref<360x1xf32, #tpu.memory_space<vmem>>, vector<360x1xf32>
    %2 = vector.extract_strided_slice %1 {offsets = [0, 0], sizes = [128, 1], strides = [1, 1]} : vector<360x1xf32> to vector<128x1xf32>
    %3 = vector.extract_strided_slice %1 {offsets = [128, 0], sizes = [128, 1], strides = [1, 1]} : vector<360x1xf32> to vector<128x1xf32>
    %4 = vector.extract_strided_slice %1 {offsets = [256, 0], sizes = [64, 1], strides = [1, 1]} : vector<360x1xf32> to vector<64x1xf32>
    %5 = vector.extract_strided_slice %1 {offsets = [320, 0], sizes = [32, 1], strides = [1, 1]} : vector<360x1xf32> to vector<32x1xf32>
    %6 = vector.extract_strided_slice %1 {offsets = [352, 0], sizes = [8, 1], strides = [1, 1]} : vector<360x1xf32> to vector<8x1xf32>
    %7 = vector.broadcast %2 : vector<128x1xf32> to vector<128x256xf32>
    %8 = vector.broadcast %0 : vector<1x256xf32> to vector<128x256xf32>
    %9 = arith.mulf %7, %8 : vector<128x256xf32>
    %10 = vector.broadcast %3 : vector<128x1xf32> to vector<128x256xf32>
    %11 = arith.addf %9, %10 : vector<128x256xf32>
    %cst = arith.constant 0.000000e+00 : f32
    %12 = vector.broadcast %cst : f32 to vector<128x256xf32>
    %13 = arith.maximumf %11, %12 : vector<128x256xf32>
    %14 = arith.truncf %13 : vector<128x256xf32> to vector<128x256xbf16>
    %c0_3 = arith.constant 0 : index
    %c0_4 = arith.constant 0 : index
    %15 = vector.load %arg3[%c0_3, %c0_4] : memref<64x128xbf16, #tpu.memory_space<vmem>>, vector<64x128xbf16>
    %cst_5 = arith.constant dense<0.000000e+00> : vector<64x256xf32>
    %16 = tpu.matmul %15, %14, %cst_5 {dimension_numbers = #tpu.dot_dimension_numbers<[1], [0], [0], [1], [0, 0, 1, 1], [], []>} : vector<64x128xbf16>, vector<128x256xbf16>, vector<64x256xf32> -> vector<64x256xf32>
    %17 = vector.broadcast %4 : vector<64x1xf32> to vector<64x256xf32>
    %18 = arith.addf %16, %17 : vector<64x256xf32>
    %cst_6 = arith.constant 0.000000e+00 : f32
    %19 = vector.broadcast %cst_6 : f32 to vector<64x256xf32>
    %20 = arith.maximumf %18, %19 : vector<64x256xf32>
    %21 = arith.truncf %20 : vector<64x256xf32> to vector<64x256xbf16>
    %c0_7 = arith.constant 0 : index
    %c0_8 = arith.constant 0 : index
    %22 = vector.load %arg4[%c0_7, %c0_8] : memref<32x64xbf16, #tpu.memory_space<vmem>>, vector<32x64xbf16>
    %cst_9 = arith.constant dense<0.000000e+00> : vector<32x256xf32>
    %23 = tpu.matmul %22, %21, %cst_9 {dimension_numbers = #tpu.dot_dimension_numbers<[1], [0], [0], [1], [0, 0, 1, 1], [], []>} : vector<32x64xbf16>, vector<64x256xbf16>, vector<32x256xf32> -> vector<32x256xf32>
    %24 = vector.broadcast %5 : vector<32x1xf32> to vector<32x256xf32>
    %25 = arith.addf %23, %24 : vector<32x256xf32>
    %cst_10 = arith.constant 0.000000e+00 : f32
    %26 = vector.broadcast %cst_10 : f32 to vector<32x256xf32>
    %27 = arith.maximumf %25, %26 : vector<32x256xf32>
    %28 = arith.truncf %27 : vector<32x256xf32> to vector<32x256xbf16>
    %c0_11 = arith.constant 0 : index
    %c0_12 = arith.constant 0 : index
    %29 = vector.load %arg5[%c0_11, %c0_12] : memref<8x32xbf16, #tpu.memory_space<vmem>>, vector<8x32xbf16>
    %cst_13 = arith.constant dense<0.000000e+00> : vector<8x256xf32>
    %30 = tpu.matmul %29, %28, %cst_13 {dimension_numbers = #tpu.dot_dimension_numbers<[1], [0], [0], [1], [0, 0, 1, 1], [], []>} : vector<8x32xbf16>, vector<32x256xbf16>, vector<8x256xf32> -> vector<8x256xf32>
    %31 = vector.broadcast %6 : vector<8x1xf32> to vector<8x256xf32>
    %32 = arith.addf %30, %31 : vector<8x256xf32>
    %c0_14 = arith.constant 0 : index
    %c0_15 = arith.constant 0 : index
    %33 = vector.load %arg6[%c0_14, %c0_15] : memref<8x256xf32, #tpu.memory_space<vmem>>, vector<8x256xf32>
    tpu.vector_store %arg6[%c0_14, %c0_15], %32 {strides = array<i32>} : memref<8x256xf32, #tpu.memory_space<vmem>>, vector<8x256xf32>,
    return
  }
  func.func @transform_0(%arg0: i32) -> (i32, i32) {
    %c0_i32 = arith.constant 0 : i32
    %c0_i32_0 = arith.constant 0 : i32
    return %c0_i32, %arg0 : i32, i32
  }
  func.func @transform_1(%arg0: i32) -> (i32, i32) {
    %c0_i32 = arith.constant 0 : i32
    %c0_i32_0 = arith.constant 0 : i32
    %c0_i32_1 = arith.constant 0 : i32
    return %c0_i32, %c0_i32_0 : i32, i32
  }
  func.func @transform_2(%arg0: i32) -> (i32, i32) {
    %c0_i32 = arith.constant 0 : i32
    %c0_i32_0 = arith.constant 0 : i32
    %c0_i32_1 = arith.constant 0 : i32
    return %c0_i32, %c0_i32_0 : i32, i32
  }
  func.func @transform_3(%arg0: i32) -> (i32, i32) {
    %c0_i32 = arith.constant 0 : i32
    %c0_i32_0 = arith.constant 0 : i32
    %c0_i32_1 = arith.constant 0 : i32
    return %c0_i32, %c0_i32_0 : i32, i32
  }
  func.func @transform_4(%arg0: i32) -> (i32, i32) {
    %c0_i32 = arith.constant 0 : i32
    %c0_i32_0 = arith.constant 0 : i32
    %c0_i32_1 = arith.constant 0 : i32
    return %c0_i32, %c0_i32_0 : i32, i32
  }
  func.func @transform_5(%arg0: i32) -> (i32, i32) {
    %c0_i32 = arith.constant 0 : i32
    %c0_i32_0 = arith.constant 0 : i32
    return %c0_i32, %arg0 : i32, i32
  }
}

</mosaic_0001>

<llo_original>
// kernel: traj_mod_forward.1
$region0: #{traj_mod_forward.1}
  #allocation0 [shape = 'u32[]', space=smem, size = 0x4, offset = 0x4, fixed_abs, tag = 'smem constant byte address 0x4 - core index']
  #allocation1 [shape = 'u32[144,128]{1,0:T(1,128)}', space=vmem, size = 0x12000, scoped, tag = 'internal scratch']
  %s0 = inlined_call_operand.vmem [shape: f32[1,256], index: 0, kind: input, shape index: {}]
  %s1 = inlined_call_operand.vmem [shape: f32[360,1], index: 1, kind: input, shape index: {}]
  %s2 = inlined_call_operand.vmem [shape: bf16[64,128], index: 2, kind: input, shape index: {}]
  %s3 = inlined_call_operand.vmem [shape: bf16[32,64], index: 3, kind: input, shape index: {}]
  %s4 = inlined_call_operand.vmem [shape: bf16[8,32], index: 4, kind: input, shape index: {}]
  %s5 = inlined_call_operand.vmem [shape: f32[8,256], index: 5, kind: output, shape index: {}]
  %s6 = sld [smem:[#allocation0]]
  $region30: #{traj_mod_forward.1} parent=0
    _
  %s8 = ssub.s32 1, %s6
  %s9 = scalar_select 0, %s8, %s6
  // Predicated region
  $region2: #{traj_mod_forward.1} parent=0 // pred_check
    _
  $region3: #{traj_mod_forward.1} parent=0 // pred_check_branch
    %11 = sbr.rel (0) target = $region5
  $region4: #{traj_mod_forward.1} parent=0 // pred_region
    _
  $region5: #{traj_mod_forward.1} parent=0 // pred_fallthru
    _
  // Predicated region
  $region6: #{traj_mod_forward.1} parent=0 // pred_check
    _
  $region7: #{traj_mod_forward.1} parent=0 // pred_check_branch
    %13 = sbr.rel (0) target = $region9
  $region8: #{traj_mod_forward.1} parent=0 // pred_region
    _
  $region9: #{traj_mod_forward.1} parent=0 // pred_fallthru
    _
  // Predicated region
  $region10: #{traj_mod_forward.1} parent=0 // pred_check
    _
  $region11: #{traj_mod_forward.1} parent=0 // pred_check_branch
    %15 = sbr.rel (0) target = $region13
  $region12: #{traj_mod_forward.1} parent=0 // pred_region
    _
  $region13: #{traj_mod_forward.1} parent=0 // pred_fallthru
    _
  // Predicated region
  $region14: #{traj_mod_forward.1} parent=0 // pred_check
    _
  $region15: #{traj_mod_forward.1} parent=0 // pred_check_branch
    %17 = sbr.rel (0) target = $region17
  $region16: #{traj_mod_forward.1} parent=0 // pred_region
    _
  $region17: #{traj_mod_forward.1} parent=0 // pred_fallthru
    _
  // Predicated region
  $region18: #{traj_mod_forward.1} parent=0 // pred_check
    _
  $region19: #{traj_mod_forward.1} parent=0 // pred_check_branch
    %19 = sbr.rel (0) target = $region21
  $region20: #{traj_mod_forward.1} parent=0 // pred_region
    _
  $region21: #{traj_mod_forward.1} parent=0 // pred_fallthru
    _
  %v21 = vld [vmem:[%s0] sm:$0x3]
  %v22 = vld [vmem:[%s1] sm:$0xff]
  %v23 = vld [vmem:[%s1 + $0x8] sm:$0xff]
  %v24 = vld [vmem:[%s1 + $0x10] sm:$0xff]
  %v25 = vld [vmem:[%s1 + $0x18] sm:$0xff]
  %v26 = vld [vmem:[%s1 + $0x20] sm:$0xff]
  %v27 = vld [vmem:[%s1 + $0x28] sm:$0xff]
  %v28 = vld [vmem:[%s1 + $0x30] sm:$0xff]
  %v29 = vld [vmem:[%s1 + $0x38] sm:$0xff]
  %v30 = vld [vmem:[%s1 + $0x40] sm:$0xff]
  %v31 = vld [vmem:[%s1 + $0x48] sm:$0xff]
  %v32 = vld [vmem:[%s1 + $0x50] sm:$0xff]
  %v33 = vld [vmem:[%s1 + $0x58] sm:$0xff]
  %v34 = vld [vmem:[%s1 + $0x60] sm:$0xff]
  %v35 = vld [vmem:[%s1 + $0x68] sm:$0xff]
  %v36 = vld [vmem:[%s1 + $0x70] sm:$0xff]
  %v37 = vld [vmem:[%s1 + $0x78] sm:$0xff]
  %v38 = vld [vmem:[%s1 + $0x80] sm:$0xff]
  %v39 = vld [vmem:[%s1 + $0x88] sm:$0xff]
  %v40 = vld [vmem:[%s1 + $0x90] sm:$0xff]
  %v41 = vld [vmem:[%s1 + $0x98] sm:$0xff]
  %v42 = vld [vmem:[%s1 + $0xa0] sm:$0xff]
  %v43 = vld [vmem:[%s1 + $0xa8] sm:$0xff]
  %v44 = vld [vmem:[%s1 + $0xb0] sm:$0xff]
  %v45 = vld [vmem:[%s1 + $0xb8] sm:$0xff]
  %v46 = vld [vmem:[%s1 + $0xc0] sm:$0xff]
  %v47 = vld [vmem:[%s1 + $0xc8] sm:$0xff]
  %v48 = vld [vmem:[%s1 + $0xd0] sm:$0xff]
  %v49 = vld [vmem:[%s1 + $0xd8] sm:$0xff]
  %v50 = vld [vmem:[%s1 + $0xe0] sm:$0xff]
  %v51 = vld [vmem:[%s1 + $0xe8] sm:$0xff]
  %v52 = vld [vmem:[%s1 + $0xf0] sm:$0xff]
  %v53 = vld [vmem:[%s1 + $0xf8] sm:$0xff]
  %v54 = vld [vmem:[%s1 + $0x100] sm:$0xff]
  %v55 = vld [vmem:[%s1 + $0x108] sm:$0xff]
  %v56 = vld [vmem:[%s1 + $0x110] sm:$0xff]
  %v57 = vld [vmem:[%s1 + $0x118] sm:$0xff]
  %v58 = vld [vmem:[%s1 + $0x120] sm:$0xff]
  %v59 = vld [vmem:[%s1 + $0x128] sm:$0xff]
  %v60 = vld [vmem:[%s1 + $0x130] sm:$0xff]
  %v61 = vld [vmem:[%s1 + $0x138] sm:$0xff]
  %v62 = vld [vmem:[%s1 + $0x140] sm:$0xff]
  %v63 = vld [vmem:[%s1 + $0x148] sm:$0xff]
  %v64 = vld [vmem:[%s1 + $0x150] sm:$0xff]
  %v65 = vld [vmem:[%s1 + $0x158] sm:$0xff]
  %v66 = vld [vmem:[%s1 + $0x160] sm:$0xff]
  %68 = vset.pattern.permute.xlu0 0
  %69 = vperm.xlu0 %68, %v22
  %v70 = vpop.permute.xlu0 %69
  %73 = vset.pattern.permute.xlu0 0
  %74 = vperm.xlu0 %73, %v23
  %v75 = vpop.permute.xlu0 %74
  %78 = vset.pattern.permute.xlu0 0
  %79 = vperm.xlu0 %78, %v24
  %v80 = vpop.permute.xlu0 %79
  %83 = vset.pattern.permute.xlu0 0
  %84 = vperm.xlu0 %83, %v25
  %v85 = vpop.permute.xlu0 %84
  %88 = vset.pattern.permute.xlu0 0
  %89 = vperm.xlu0 %88, %v26
  %v90 = vpop.permute.xlu0 %89
  %93 = vset.pattern.permute.xlu0 0
  %94 = vperm.xlu0 %93, %v27
  %v95 = vpop.permute.xlu0 %94
  %98 = vset.pattern.permute.xlu0 0
  %99 = vperm.xlu0 %98, %v28
  %v100 = vpop.permute.xlu0 %99
  %103 = vset.pattern.permute.xlu0 0
  %104 = vperm.xlu0 %103, %v29
  %v105 = vpop.permute.xlu0 %104
  %108 = vset.pattern.permute.xlu0 0
  %109 = vperm.xlu0 %108, %v30
  %v110 = vpop.permute.xlu0 %109
  %113 = vset.pattern.permute.xlu0 0
  %114 = vperm.xlu0 %113, %v31
  %v115 = vpop.permute.xlu0 %114
  %118 = vset.pattern.permute.xlu0 0
  %119 = vperm.xlu0 %118, %v32
  %v120 = vpop.permute.xlu0 %119
  %123 = vset.pattern.permute.xlu0 0
  %124 = vperm.xlu0 %123, %v33
  %v125 = vpop.permute.xlu0 %124
  %128 = vset.pattern.permute.xlu0 0
  %129 = vperm.xlu0 %128, %v34
  %v130 = vpop.permute.xlu0 %129
  %133 = vset.pattern.permute.xlu0 0
  %134 = vperm.xlu0 %133, %v35
  %v135 = vpop.permute.xlu0 %134
  %138 = vset.pattern.permute.xlu0 0
  %139 = vperm.xlu0 %138, %v36
  %v140 = vpop.permute.xlu0 %139
  %143 = vset.pattern.permute.xlu0 0
  %144 = vperm.xlu0 %143, %v37
  %v145 = vpop.permute.xlu0 %144
  %v148 = vlaneseq
  %v149 = vshrl.u32 %v148, 7
  %v150 = vsub.s32 0, %v149
  %v151 = vrot.slane %v21, %v150
  %v152 = vlaneseq
  %v153 = vshrl.u32 %v152, 7
  %v154 = vsub.s32 1, %v153
  %v155 = vrot.slane %v21, %v154
  %v158 = vmul.f32 %v70, %v151
  %v159 = vmul.f32 %v70, %v155
  %v160 = vmul.f32 %v75, %v151
  %v161 = vmul.f32 %v75, %v155
  %v162 = vmul.f32 %v80, %v151
  %v163 = vmul.f32 %v80, %v155
  %v164 = vmul.f32 %v85, %v151
  %v165 = vmul.f32 %v85, %v155
  %v166 = vmul.f32 %v90, %v151
  %v167 = vmul.f32 %v90, %v155
  %v168 = vmul.f32 %v95, %v151
  %v169 = vmul.f32 %v95, %v155
  %v170 = vmul.f32 %v100, %v151
  %v171 = vmul.f32 %v100, %v155
  %v172 = vmul.f32 %v105, %v151
  %v173 = vmul.f32 %v105, %v155
  %v174 = vmul.f32 %v110, %v151
  %v175 = vmul.f32 %v110, %v155
  %v176 = vmul.f32 %v115, %v151
  %v177 = vmul.f32 %v115, %v155
  %v178 = vmul.f32 %v120, %v151
  %v179 = vmul.f32 %v120, %v155
  %v180 = vmul.f32 %v125, %v151
  %v181 = vmul.f32 %v125, %v155
  %v182 = vmul.f32 %v130, %v151
  %v183 = vmul.f32 %v130, %v155
  %v184 = vmul.f32 %v135, %v151
  %v185 = vmul.f32 %v135, %v155
  %v186 = vmul.f32 %v140, %v151
  %v187 = vmul.f32 %v140, %v155
  %v188 = vmul.f32 %v145, %v151
  %v189 = vmul.f32 %v145, %v155
  %191 = vset.pattern.permute.xlu0 0
  %192 = vperm.xlu0 %191, %v38
  %v193 = vpop.permute.xlu0 %192
  %196 = vset.pattern.permute.xlu0 0
  %197 = vperm.xlu0 %196, %v39
  %v198 = vpop.permute.xlu0 %197
  %201 = vset.pattern.permute.xlu0 0
  %202 = vperm.xlu0 %201, %v40
  %v203 = vpop.permute.xlu0 %202
  %206 = vset.pattern.permute.xlu0 0
  %207 = vperm.xlu0 %206, %v41
  %v208 = vpop.permute.xlu0 %207
  %211 = vset.pattern.permute.xlu0 0
  %212 = vperm.xlu0 %211, %v42
  %v213 = vpop.permute.xlu0 %212
  %216 = vset.pattern.permute.xlu0 0
  %217 = vperm.xlu0 %216, %v43
  %v218 = vpop.permute.xlu0 %217
  %221 = vset.pattern.permute.xlu0 0
  %222 = vperm.xlu0 %221, %v44
  %v223 = vpop.permute.xlu0 %222
  %226 = vset.pattern.permute.xlu0 0
  %227 = vperm.xlu0 %226, %v45
  %v228 = vpop.permute.xlu0 %227
  %231 = vset.pattern.permute.xlu0 0
  %232 = vperm.xlu0 %231, %v46
  %v233 = vpop.permute.xlu0 %232
  %236 = vset.pattern.permute.xlu0 0
  %237 = vperm.xlu0 %236, %v47
  %v238 = vpop.permute.xlu0 %237
  %241 = vset.pattern.permute.xlu0 0
  %242 = vperm.xlu0 %241, %v48
  %v243 = vpop.permute.xlu0 %242
  %246 = vset.pattern.permute.xlu0 0
  %247 = vperm.xlu0 %246, %v49
  %v248 = vpop.permute.xlu0 %247
  %251 = vset.pattern.permute.xlu0 0
  %252 = vperm.xlu0 %251, %v50
  %v253 = vpop.permute.xlu0 %252
  %256 = vset.pattern.permute.xlu0 0
  %257 = vperm.xlu0 %256, %v51
  %v258 = vpop.permute.xlu0 %257
  %261 = vset.pattern.permute.xlu0 0
  %262 = vperm.xlu0 %261, %v52
  %v263 = vpop.permute.xlu0 %262
  %266 = vset.pattern.permute.xlu0 0
  %267 = vperm.xlu0 %266, %v53
  %v268 = vpop.permute.xlu0 %267
  %v270 = vadd.f32 %v158, %v193
  %v271 = vadd.f32 %v159, %v193
  %v272 = vadd.f32 %v160, %v198
  %v273 = vadd.f32 %v161, %v198
  %v274 = vadd.f32 %v162, %v203
  %v275 = vadd.f32 %v163, %v203
  %v276 = vadd.f32 %v164, %v208
  %v277 = vadd.f32 %v165, %v208
  %v278 = vadd.f32 %v166, %v213
  %v279 = vadd.f32 %v167, %v213
  %v280 = vadd.f32 %v168, %v218
  %v281 = vadd.f32 %v169, %v218
  %v282 = vadd.f32 %v170, %v223
  %v283 = vadd.f32 %v171, %v223
  %v284 = vadd.f32 %v172, %v228
  %v285 = vadd.f32 %v173, %v228
  %v286 = vadd.f32 %v174, %v233
  %v287 = vadd.f32 %v175, %v233
  %v288 = vadd.f32 %v176, %v238
  %v289 = vadd.f32 %v177, %v238
  %v290 = vadd.f32 %v178, %v243
  %v291 = vadd.f32 %v179, %v243
  %v292 = vadd.f32 %v180, %v248
  %v293 = vadd.f32 %v181, %v248
  %v294 = vadd.f32 %v182, %v253
  %v295 = vadd.f32 %v183, %v253
  %v296 = vadd.f32 %v184, %v258
  %v297 = vadd.f32 %v185, %v258
  %v298 = vadd.f32 %v186, %v263
  %v299 = vadd.f32 %v187, %v263
  %v300 = vadd.f32 %v188, %v268
  %v301 = vadd.f32 %v189, %v268
  %v302 = vmax.f32 %v270, 0.0
  %v303 = vmax.f32 %v271, 0.0
  %v304 = vmax.f32 %v272, 0.0
  %v305 = vmax.f32 %v273, 0.0
  %v306 = vmax.f32 %v274, 0.0
  %v307 = vmax.f32 %v275, 0.0
  %v308 = vmax.f32 %v276, 0.0
  %v309 = vmax.f32 %v277, 0.0
  %v310 = vmax.f32 %v278, 0.0
  %v311 = vmax.f32 %v279, 0.0
  %v312 = vmax.f32 %v280, 0.0
  %v313 = vmax.f32 %v281, 0.0
  %v314 = vmax.f32 %v282, 0.0
  %v315 = vmax.f32 %v283, 0.0
  %v316 = vmax.f32 %v284, 0.0
  %v317 = vmax.f32 %v285, 0.0
  %v318 = vmax.f32 %v286, 0.0
  %v319 = vmax.f32 %v287, 0.0
  %v320 = vmax.f32 %v288, 0.0
  %v321 = vmax.f32 %v289, 0.0
  %v322 = vmax.f32 %v290, 0.0
  %v323 = vmax.f32 %v291, 0.0
  %v324 = vmax.f32 %v292, 0.0
  %v325 = vmax.f32 %v293, 0.0
  %v326 = vmax.f32 %v294, 0.0
  %v327 = vmax.f32 %v295, 0.0
  %v328 = vmax.f32 %v296, 0.0
  %v329 = vmax.f32 %v297, 0.0
  %v330 = vmax.f32 %v298, 0.0
  %v331 = vmax.f32 %v299, 0.0
  %v332 = vmax.f32 %v300, 0.0
  %v333 = vmax.f32 %v301, 0.0
  %v334 = vpack.c.bf16 %v304, %v302
  %v335 = vpack.c.bf16 %v305, %v303
  %v336 = vpack.c.bf16 %v308, %v306
  %v337 = vpack.c.bf16 %v309, %v307
  %v338 = vpack.c.bf16 %v312, %v310
  %v339 = vpack.c.bf16 %v313, %v311
  %v340 = vpack.c.bf16 %v316, %v314
  %v341 = vpack.c.bf16 %v317, %v315
  %v342 = vpack.c.bf16 %v320, %v318
  %v343 = vpack.c.bf16 %v321, %v319
  %v344 = vpack.c.bf16 %v324, %v322
  %v345 = vpack.c.bf16 %v325, %v323
  %v346 = vpack.c.bf16 %v328, %v326
  %v347 = vpack.c.bf16 %v329, %v327
  %v348 = vpack.c.bf16 %v332, %v330
  %v349 = vpack.c.bf16 %v333, %v331
  %v350 = vld [vmem:[%s2] sm:$0xf]
  %v351 = vld [vmem:[%s2 + $0x4] sm:$0xf]
  %v352 = vld [vmem:[%s2 + $0x8] sm:$0xf]
  %v353 = vld [vmem:[%s2 + $0xc] sm:$0xf]
  %v354 = vld [vmem:[%s2 + $0x10] sm:$0xf]
  %v355 = vld [vmem:[%s2 + $0x14] sm:$0xf]
  %v356 = vld [vmem:[%s2 + $0x18] sm:$0xf]
  %v357 = vld [vmem:[%s2 + $0x1c] sm:$0xf]
  %359 = vset.pattern.permute.xlu0 0
  %360 = vperm.xlu0 %359, %v54
  %v361 = vpop.permute.xlu0 %360
  %364 = vset.pattern.permute.xlu0 0
  %365 = vperm.xlu0 %364, %v55
  %v366 = vpop.permute.xlu0 %365
  %369 = vset.pattern.permute.xlu0 0
  %370 = vperm.xlu0 %369, %v56
  %v371 = vpop.permute.xlu0 %370
  %374 = vset.pattern.permute.xlu0 0
  %375 = vperm.xlu0 %374, %v57
  %v376 = vpop.permute.xlu0 %375
  %379 = vset.pattern.permute.xlu0 0
  %380 = vperm.xlu0 %379, %v58
  %v381 = vpop.permute.xlu0 %380
  %384 = vset.pattern.permute.xlu0 0
  %385 = vperm.xlu0 %384, %v59
  %v386 = vpop.permute.xlu0 %385
  %389 = vset.pattern.permute.xlu0 0
  %390 = vperm.xlu0 %389, %v60
  %v391 = vpop.permute.xlu0 %390
  %394 = vset.pattern.permute.xlu0 0
  %395 = vperm.xlu0 %394, %v61
  %v396 = vpop.permute.xlu0 %395
  %v406 = vunpack.c.l.b16 %v350
  %v407 = vunpack.c.l.b16 %v351
  %v408 = vunpack.c.l.b16 %v352
  %v409 = vunpack.c.l.b16 %v353
  %v410 = vunpack.c.l.b16 %v354
  %v411 = vunpack.c.l.b16 %v355
  %v412 = vunpack.c.l.b16 %v356
  %v413 = vunpack.c.l.b16 %v357
  %v414 = vpack.c.b16 %v407, %v406
  %v415 = vpack.c.b16 %v409, %v408
  %v416 = vpack.c.b16 %v411, %v410
  %v417 = vpack.c.b16 %v413, %v412
  %422 = vmatprep.subr.bf16.mxu0 %v335
  %423 = vmatpush1.bf16.msra.mxu0 %v334
  %424 = vmatprep.subr.bf16.mxu0 %v337
  %425 = vmatpush1.bf16.msra.mxu0 %v336
  %426 = vmatprep.subr.bf16.mxu0 %v339
  %427 = vmatpush1.bf16.msra.mxu0 %v338
  %428 = vmatprep.subr.bf16.mxu0 %v341
  %429 = vmatpush1.bf16.msra.mxu0 %v340
  %430 = vmatprep.subr.bf16.mxu0 %v343
  %431 = vmatpush1.bf16.msra.mxu0 %v342
  %432 = vmatprep.subr.bf16.mxu0 %v345
  %433 = vmatpush1.bf16.msra.mxu0 %v344
  %434 = vmatprep.subr.bf16.mxu0 %v347
  %435 = vmatpush1.bf16.msra.mxu0 %v346
  %436 = vmatprep.subr.bf16.mxu0 %v349
  %437 = vmatpush1.bf16.msra.mxu0 %v348
  %438 = vmatprep.subr.bf16.mxu0 0
  %439 = vmatpush1.bf16.msra.mxu0 0
  %440 = vmatprep.subr.bf16.mxu0 0
  %441 = vmatpush1.bf16.msra.mxu0 0
  %442 = vmatprep.subr.bf16.mxu0 0
  %443 = vmatpush1.bf16.msra.mxu0 0
  %444 = vmatprep.subr.bf16.mxu0 0
  %445 = vmatpush1.bf16.msra.mxu0 0
  %446 = vmatprep.subr.bf16.mxu0 0
  %447 = vmatpush1.bf16.msra.mxu0 0
  %448 = vmatprep.subr.bf16.mxu0 0
  %449 = vmatpush1.bf16.msra.mxu0 0
  %450 = vmatprep.subr.bf16.mxu0 0
  %451 = vmatpush1.bf16.msra.mxu0 0
  %452 = vmatprep.subr.bf16.mxu0 0
  %453 = vmatpush1.bf16.msra.mxu0 0
  %454 = vmatprep.mubr.bf16.mxu0 0
  %455 = vmatmul.mubr.bf16.gmra.mrb[0].mxu0 %v414
  %v456 = vpop.f32.mrb[0].mxu0
  %v457 = vadd.f32 %v361, %v456
  %v458 = vpop.f32.mrb[0].mxu0
  %v459 = vadd.f32 %v361, %v458
  %v460 = vpop.f32.mrb[0].mxu0
  %v461 = vadd.f32 %v366, %v460
  %v462 = vpop.f32.mrb[0].mxu0
  %v463 = vadd.f32 %v366, %v462
  %464 = vmatprep.mubr.bf16.mxu0 0
  %465 = vmatmul.mubr.bf16.gmra.mrb[0].mxu0 %v415
  %v466 = vpop.f32.mrb[0].mxu0
  %v467 = vadd.f32 %v371, %v466
  %v468 = vpop.f32.mrb[0].mxu0
  %v469 = vadd.f32 %v371, %v468
  %v470 = vpop.f32.mrb[0].mxu0
  %v471 = vadd.f32 %v376, %v470
  %v472 = vpop.f32.mrb[0].mxu0
  %v473 = vadd.f32 %v376, %v472
  %474 = vmatprep.mubr.bf16.mxu0 0
  %475 = vmatmul.mubr.bf16.gmra.mrb[0].mxu0 %v416
  %v476 = vpop.f32.mrb[0].mxu0
  %v477 = vadd.f32 %v381, %v476
  %v478 = vpop.f32.mrb[0].mxu0
  %v479 = vadd.f32 %v381, %v478
  %v480 = vpop.f32.mrb[0].mxu0
  %v481 = vadd.f32 %v386, %v480
  %v482 = vpop.f32.mrb[0].mxu0
  %v483 = vadd.f32 %v386, %v482
  %484 = vmatprep.mubr.bf16.mxu0 0
  %485 = vmatmul.mubr.bf16.gmra.mrb[0].mxu0 %v417
  %v486 = vpop.f32.mrb[0].mxu0
  %v487 = vadd.f32 %v391, %v486
  %v488 = vpop.f32.mrb[0].mxu0
  %v489 = vadd.f32 %v391, %v488
  %v490 = vpop.f32.mrb[0].mxu0
  %v491 = vadd.f32 %v396, %v490
  %v492 = vpop.f32.mrb[0].mxu0
  %v493 = vadd.f32 %v396, %v492
  %494 = vdwg.mxu0
  %v495 = vmax.f32 %v457, 0.0
  %v496 = vmax.f32 %v459, 0.0
  %v497 = vmax.f32 %v461, 0.0
  %v498 = vmax.f32 %v463, 0.0
  %v499 = vmax.f32 %v467, 0.0
  %v500 = vmax.f32 %v469, 0.0
  %v501 = vmax.f32 %v471, 0.0
  %v502 = vmax.f32 %v473, 0.0
  %v503 = vmax.f32 %v477, 0.0
  %v504 = vmax.f32 %v479, 0.0
  %v505 = vmax.f32 %v481, 0.0
  %v506 = vmax.f32 %v483, 0.0
  %v507 = vmax.f32 %v487, 0.0
  %v508 = vmax.f32 %v489, 0.0
  %v509 = vmax.f32 %v491, 0.0
  %v510 = vmax.f32 %v493, 0.0
  %v511 = vpack.c.bf16 %v497, %v495
  %v512 = vpack.c.bf16 %v498, %v496
  %v513 = vpack.c.bf16 %v501, %v499
  %v514 = vpack.c.bf16 %v502, %v500
  %v515 = vpack.c.bf16 %v505, %v503
  %v516 = vpack.c.bf16 %v506, %v504
  %v517 = vpack.c.bf16 %v509, %v507
  %v518 = vpack.c.bf16 %v510, %v508
  %v519 = vld [vmem:[%s3] sm:$0xf]
  %v520 = vld [vmem:[%s3 + $0x4] sm:$0xf]
  %v521 = vld [vmem:[%s3 + $0x8] sm:$0xf]
  %v522 = vld [vmem:[%s3 + $0xc] sm:$0xf]
  %524 = vset.pattern.permute.xlu0 0
  %525 = vperm.xlu0 %524, %v62
  %v526 = vpop.permute.xlu0 %525
  %529 = vset.pattern.permute.xlu0 0
  %530 = vperm.xlu0 %529, %v63
  %v531 = vpop.permute.xlu0 %530
  %534 = vset.pattern.permute.xlu0 0
  %535 = vperm.xlu0 %534, %v64
  %v536 = vpop.permute.xlu0 %535
  %539 = vset.pattern.permute.xlu0 0
  %540 = vperm.xlu0 %539, %v65
  %v541 = vpop.permute.xlu0 %540
  %v547 = vunpack.c.l.b16 %v519
  %v548 = vunpack.c.l.b16 %v520
  %v549 = vunpack.c.l.b16 %v521
  %v550 = vunpack.c.l.b16 %v522
  %v551 = vpack.c.b16 %v548, %v547
  %v552 = vpack.c.b16 %v550, %v549
  %vm553 = vcmask 523264
  %v555 = vsel %vm553, %v551, 0
  %v558 = vsel %vm553, %v552, 0
  %560 = vmatprep.subr.bf16.mxu0 %v512
  %561 = vmatpush1.bf16.msra.mxu0 %v511
  %562 = vmatprep.subr.bf16.mxu0 %v514
  %563 = vmatpush1.bf16.msra.mxu0 %v513
  %564 = vmatprep.subr.bf16.mxu0 %v516
  %565 = vmatpush1.bf16.msra.mxu0 %v515
  %566 = vmatprep.subr.bf16.mxu0 %v518
  %567 = vmatpush1.bf16.msra.mxu0 %v517
  %568 = vmatprep.subr.bf16.mxu0 0
  %569 = vmatpush1.bf16.msra.mxu0 0
  %570 = vmatprep.subr.bf16.mxu0 0
  %571 = vmatpush1.bf16.msra.mxu0 0
  %572 = vmatprep.subr.bf16.mxu0 0
  %573 = vmatpush1.bf16.msra.mxu0 0
  %574 = vmatprep.subr.bf16.mxu0 0
  %575 = vmatpush1.bf16.msra.mxu0 0
  %576 = vmatprep.subr.bf16.mxu0 0
  %577 = vmatpush1.bf16.msra.mxu0 0
  %578 = vmatprep.subr.bf16.mxu0 0
  %579 = vmatpush1.bf16.msra.mxu0 0
  %580 = vmatprep.subr.bf16.mxu0 0
  %581 = vmatpush1.bf16.msra.mxu0 0
  %582 = vmatprep.subr.bf16.mxu0 0
  %583 = vmatpush1.bf16.msra.mxu0 0
  %584 = vmatprep.subr.bf16.mxu0 0
  %585 = vmatpush1.bf16.msra.mxu0 0
  %586 = vmatprep.subr.bf16.mxu0 0
  %587 = vmatpush1.bf16.msra.mxu0 0
  %588 = vmatprep.subr.bf16.mxu0 0
  %589 = vmatpush1.bf16.msra.mxu0 0
  %590 = vmatprep.subr.bf16.mxu0 0
  %591 = vmatpush1.bf16.msra.mxu0 0
  %592 = vmatprep.mubr.bf16.mxu0 0
  %593 = vmatmul.mubr.bf16.gmra.mrb[0].mxu0 %v555
  %v594 = vpop.f32.mrb[0].mxu0
  %v595 = vadd.f32 %v526, %v594
  %v596 = vpop.f32.mrb[0].mxu0
  %v597 = vadd.f32 %v526, %v596
  %v598 = vpop.f32.mrb[0].mxu0
  %v599 = vadd.f32 %v531, %v598
  %v600 = vpop.f32.mrb[0].mxu0
  %v601 = vadd.f32 %v531, %v600
  %602 = vmatprep.mubr.bf16.mxu0 0
  %603 = vmatmul.mubr.bf16.gmra.mrb[0].mxu0 %v558
  %v604 = vpop.f32.mrb[0].mxu0
  %v605 = vadd.f32 %v536, %v604
  %v606 = vpop.f32.mrb[0].mxu0
  %v607 = vadd.f32 %v536, %v606
  %v608 = vpop.f32.mrb[0].mxu0
  %v609 = vadd.f32 %v541, %v608
  %v610 = vpop.f32.mrb[0].mxu0
  %v611 = vadd.f32 %v541, %v610
  %612 = vdwg.mxu0
  %v613 = vmax.f32 %v595, 0.0
  %v614 = vmax.f32 %v597, 0.0
  %v615 = vmax.f32 %v599, 0.0
  %v616 = vmax.f32 %v601, 0.0
  %v617 = vmax.f32 %v605, 0.0
  %v618 = vmax.f32 %v607, 0.0
  %v619 = vmax.f32 %v609, 0.0
  %v620 = vmax.f32 %v611, 0.0
  %v621 = vpack.c.bf16 %v615, %v613
  %v622 = vpack.c.bf16 %v616, %v614
  %v623 = vpack.c.bf16 %v619, %v617
  %v624 = vpack.c.bf16 %v620, %v618
  %v625 = vld [vmem:[%s4] sm:$0xf]
  %627 = vset.pattern.permute.xlu0 0
  %628 = vperm.xlu0 %627, %v66
  %v629 = vpop.permute.xlu0 %628
  %vm631 = vcmask 261120
  %v633 = vsel %vm631, %v625, 0
  %635 = vmatprep.subr.bf16.mxu0 %v622
  %636 = vmatpush1.bf16.msra.mxu0 %v621
  %637 = vmatprep.subr.bf16.mxu0 %v624
  %638 = vmatpush1.bf16.msra.mxu0 %v623
  %639 = vmatprep.subr.bf16.mxu0 0
  %640 = vmatpush1.bf16.msra.mxu0 0
  %641 = vmatprep.subr.bf16.mxu0 0
  %642 = vmatpush1.bf16.msra.mxu0 0
  %643 = vmatprep.subr.bf16.mxu0 0
  %644 = vmatpush1.bf16.msra.mxu0 0
  %645 = vmatprep.subr.bf16.mxu0 0
  %646 = vmatpush1.bf16.msra.mxu0 0
  %647 = vmatprep.subr.bf16.mxu0 0
  %648 = vmatpush1.bf16.msra.mxu0 0
  %649 = vmatprep.subr.bf16.mxu0 0
  %650 = vmatpush1.bf16.msra.mxu0 0
  %651 = vmatprep.subr.bf16.mxu0 0
  %652 = vmatpush1.bf16.msra.mxu0 0
  %653 = vmatprep.subr.bf16.mxu0 0
  %654 = vmatpush1.bf16.msra.mxu0 0
  %655 = vmatprep.subr.bf16.mxu0 0
  %656 = vmatpush1.bf16.msra.mxu0 0
  %657 = vmatprep.subr.bf16.mxu0 0
  %658 = vmatpush1.bf16.msra.mxu0 0
  %659 = vmatprep.subr.bf16.mxu0 0
  %660 = vmatpush1.bf16.msra.mxu0 0
  %661 = vmatprep.subr.bf16.mxu0 0
  %662 = vmatpush1.bf16.msra.mxu0 0
  %663 = vmatprep.subr.bf16.mxu0 0
  %664 = vmatpush1.bf16.msra.mxu0 0
  %665 = vmatprep.subr.bf16.mxu0 0
  %666 = vmatpush1.bf16.msra.mxu0 0
  %667 = vmatprep.mubr.bf16.mxu0 0
  %668 = vmatmul.mubr.bf16.gmra.mrb[0].mxu0 %v633
  %v669 = vpop.f32.mrb[0].mxu0
  %v670 = vadd.f32 %v629, %v669
  %v671 = vpop.f32.mrb[0].mxu0
  %v672 = vadd.f32 %v629, %v671
  %v673 = vpop.f32.mrb[0].mxu0
  %v674 = vpop.f32.mrb[0].mxu0
  %675 = vdwg.mxu0
  %676 = vst [vmem:[%s5] sm:$0xff] %v670
  %677 = vst [vmem:[%s5 + $0x8] sm:$0xff] %v672
  // Predicated region
  $region22: #{traj_mod_forward.1} parent=0 // pred_check
    _
  $region23: #{traj_mod_forward.1} parent=0 // pred_check_branch
    %679 = sbr.rel (0) target = $region25
  $region24: #{traj_mod_forward.1} parent=0 // pred_region
    _
  $region25: #{traj_mod_forward.1} parent=0 // pred_fallthru
    _
  // Predicated region
  $region26: #{traj_mod_forward.1} parent=0 // pred_check
    _
  $region27: #{traj_mod_forward.1} parent=0 // pred_check_branch
    %681 = sbr.rel (0) target = $region29
  $region28: #{traj_mod_forward.1} parent=0 // pred_region
    _
  $region29: #{traj_mod_forward.1} parent=0 // pred_fallthru
    _

</llo_original>
